<compile_context>
chip_gen: v7x
topology: tpu7x:2x2x1
jax: 0.10.0
libtpu: 0.0.40
codegen_flags: <defaults>
</compile_context>

<pallas_src>
import functools

import jax
import jax.numpy as jnp
from jax.experimental import pallas as pl
from jax.experimental.pallas import tpu as pltpu

# NOTE: the PyTorch module uses epsilon = 1e-12, but (1 - 1e-12) == 1.0 in
# float32, so the intended guard against arctanh(+-1) is a no-op there.  We
# use a representable clamp instead: identical result for any |x| <= 1 - 1e-7
# and finite (instead of inf/nan) at exactly +-1.
_ATANH_CLAMP = 1e-7


def _col_tile(cols, cap=1024):
    """Largest multiple-of-128 column tile <= cap that divides `cols`; falls
    back to the full width (allowed when it equals the array dim)."""
    if cols <= cap or cols % 128 != 0:
        return cols
    t = cap - (cap % 128)
    while t >= 128:
        if cols % t == 0:
            return t
        t -= 128
    return cols


def _row_tile(rows, cols_bytes, budget_bytes=4 * 1024 * 1024, cap=1024):
    """Largest row tile <= cap that divides `rows`, is a multiple of 8, and
    keeps one (tile, cols) buffer under `budget_bytes` (v7x-safe double
    buffering headroom)."""
    limit = min(cap, max(8, budget_bytes // max(cols_bytes, 1)), rows)
    t = limit - (limit % 8)
    while t >= 8:
        if rows % t == 0:
            return t
        t -= 8
    return rows  # tiny / odd row counts: single full block


# --------------------------------------------------------------------------
# Kernel 1: batched projection  out = arctanh(clamp(x)) @ R_all
#   x: (tm, F) f32 row tile, R_all col tile: (F, tn) bf16, out (tm, tn) f32.
# --------------------------------------------------------------------------
def _project_kernel(x_ref, r_ref, o_ref):
    # arctanh(z) = 0.5 * log((1 + z) / (1 - z)); f32 on VPU/EUP, then bf16
    # operands into the MXU with f32 accumulation.
    z = jnp.clip(x_ref[...], -1.0 + _ATANH_CLAMP, 1.0 - _ATANH_CLAMP)
    at = 0.5 * jnp.log((1.0 + z) / (1.0 - z))
    o_ref[...] = jnp.dot(at.astype(jnp.bfloat16), r_ref[...],
                         preferred_element_type=jnp.float32)


def project_all(x, r_all_bf16):
    """arctanh(clamp(x)) @ r_all ;  x: (M, F) f32,  r_all: (F, P_total) bf16."""
    m, f = x.shape
    f2, p_total = r_all_bf16.shape
    assert f == f2
    tn = _col_tile(p_total)
    tm = _row_tile(m, cols_bytes=4 * (tn + f))
    return pl.pallas_call(
        _project_kernel,
        out_shape=jax.ShapeDtypeStruct((m, p_total), jnp.float32),
        grid=(m // tm, p_total // tn),
        in_specs=[
            pl.BlockSpec((tm, f), lambda i, j: (i, 0)),   # x resident over j
            pl.BlockSpec((f, tn), lambda i, j: (0, j)),   # R column tile
        ],
        out_specs=pl.BlockSpec((tm, tn), lambda i, j: (i, j)),
        compiler_params=pltpu.CompilerParams(
            dimension_semantics=("parallel", "parallel")),
    )(x, r_all_bf16)


# --------------------------------------------------------------------------
# Kernel 2: streaming mean(|x - y|) over the whole array (p=1 Wasserstein
# after per-column sorting).  Grid over row tiles, resident (1,1) accumulator.
# --------------------------------------------------------------------------
def _mad_sum_kernel(x_ref, y_ref, o_ref, *, inv_count):
    i = pl.program_id(0)

    @pl.when(i == 0)
    def _init():
        o_ref[...] = jnp.zeros_like(o_ref)

    o_ref[...] += jnp.sum(jnp.abs(x_ref[...] - y_ref[...]), keepdims=True)

    @pl.when(i == pl.num_programs(0) - 1)
    def _finalize():
        o_ref[...] = o_ref[...] * inv_count


def mean_abs_diff(x, y):
    rows, cols = x.shape
    tr = _row_tile(rows, cols_bytes=8 * cols)
    kernel = functools.partial(_mad_sum_kernel, inv_count=1.0 / (rows * cols))
    out = pl.pallas_call(
        kernel,
        out_shape=jax.ShapeDtypeStruct((1, 1), jnp.float32),
        grid=(rows // tr,),
        in_specs=[pl.BlockSpec((tr, cols), lambda i: (i, 0)),
                  pl.BlockSpec((tr, cols), lambda i: (i, 0))],
        out_specs=pl.BlockSpec((1, 1), lambda i: (0, 0)),  # resident accumulator
        compiler_params=pltpu.CompilerParams(
            dimension_semantics=("arbitrary",)),
    )(x, y)
    return out[0, 0]


# --------------------------------------------------------------------------
# SWDLoss.forward (random_projection provided; optional weight_index path)
# --------------------------------------------------------------------------
def swd_loss_forward(free_predicts, predicts, free_targets, targets,
                     random_projection, gamma=1, weight_gamma=None,
                     weight_index=None):
    # wd_loss = mean over columns of mean(|sort(targets) - sort(predicts)|)
    #         == global mean, since every column has the same event count.
    # TODO(synk): per-column sort done in plain JAX (no Pallas TPU sort lowering).
    if gamma == 0:
        wd_loss = jnp.float32(0.0)
    else:
        wd_loss = mean_abs_diff(jnp.sort(targets, axis=0),
                                jnp.sort(predicts, axis=0))
        if weight_index is not None and weight_gamma not in (None, 0):
            wd_loss = wd_loss + weight_gamma * mean_abs_diff(
                jnp.sort(targets[:, weight_index], axis=0),
                jnp.sort(predicts[:, weight_index], axis=0))

    n_rep, f_dim, p_dim = random_projection.shape
    n = free_targets.shape[0]

    # Batch every rep into one wide projector (F, n_rep*P) and both inputs
    # into one (2N, F) matrix -> a single projection pallas_call with arctanh
    # computed once per input element.
    r_all = jnp.transpose(random_projection, (1, 0, 2)).reshape(
        f_dim, n_rep * p_dim).astype(jnp.bfloat16)
    x_all = jnp.concatenate([free_targets, free_predicts], axis=0)
    proj = project_all(x_all, r_all)                 # (2N, n_rep*P) f32
    proj_t, proj_p = proj[:n], proj[n:]

    # One streaming reduction over (N, n_rep*P) == (1/n_rep) * sum of per-rep
    # means, since each rep contributes the same number of elements.
    swd_loss = mean_abs_diff(jnp.sort(proj_t, axis=0),
                             jnp.sort(proj_p, axis=0))

    return gamma * wd_loss + swd_loss


# --------------------------------------------------------------------------
# Pure-JAX reference (mirrors the PyTorch module semantics, f32 throughout)
# --------------------------------------------------------------------------
def ref_forward(free_predicts, predicts, free_targets, targets,
                random_projection, gamma=1):
    def wd(x, y):
        xs = jnp.sort(x, axis=0)
        ys = jnp.sort(y, axis=0)
        return jnp.mean(jnp.mean(jnp.abs(xs - ys), axis=0))

    def atanh(x):
        z = jnp.clip(x, -1.0 + _ATANH_CLAMP, 1.0 - _ATANH_CLAMP)
        return jnp.arctanh(z)

    wd_loss = wd(targets, predicts)
    swd_loss = 0.0
    for i in range(random_projection.shape[0]):
        xt = atanh(free_targets) @ random_projection[i]
        xp = atanh(free_predicts) @ random_projection[i]
        swd_loss = swd_loss + wd(xt, xp)
    swd_loss = swd_loss / random_projection.shape[0]
    return gamma * wd_loss + swd_loss


if __name__ == "__main__":
    key = jax.random.PRNGKey(0)
    k1, k2, k3, k4, k5 = jax.random.split(key, 5)

    N, Q, D_FREE, P_DIM, N_REP = 16, 8, 32, 128, 2

    predicts = jax.random.normal(k1, (N, Q), jnp.float32)
    targets = jax.random.normal(k2, (N, Q), jnp.float32)
    # free_* must lie in (-1, 1) since forward applies arctanh
    free_predicts = jnp.tanh(jax.random.normal(k3, (N, D_FREE), jnp.float32))
    free_targets = jnp.tanh(jax.random.normal(k4, (N, D_FREE), jnp.float32))

    # Deterministic random projectors, column-normalized (as in projector())
    rp = jax.random.normal(k5, (N_REP, D_FREE, P_DIM), jnp.float32)
    rp = rp / jnp.sqrt(jnp.sum(rp ** 2, axis=1, keepdims=True))

    fwd = jax.jit(lambda fp, p, ft, t, r: swd_loss_forward(fp, p, ft, t, r,
                                                           gamma=1))
    out = fwd(free_predicts, predicts, free_targets, targets, rp)
    out = jax.block_until_ready(out)

    ref = ref_forward(free_predicts, predicts, free_targets, targets,
                      rp, gamma=1)
    ref = jax.block_until_ready(ref)

    err = abs(float(out) - float(ref))
    assert err <= 1e-2 * max(1.0, abs(float(ref))), (
        f"mismatch: pallas={float(out)} ref={float(ref)}")

    print("KERNEL_OK")
</pallas_src>

<mosaic_0001>
module attributes {stable_mosaic.version = 11 : i64} {
  func.func @_project_kernel(%arg0: i32, %arg1: i32, %arg2: memref<32x32xf32, #tpu.memory_space<vmem>>, %arg3: memref<32x256xbf16, #tpu.memory_space<vmem>>, %arg4: memref<32x256xf32, #tpu.memory_space<vmem>>) attributes {dimension_semantics = [#tpu.dimension_semantics<parallel>, #tpu.dimension_semantics<parallel>], iteration_bounds = array<i64: 1, 1>, scalar_prefetch = 0 : i64, scratch_operands = 0 : i64, tpu.core_type = #tpu.core_type<tc>, window_params = [{transform_indices = @transform_0, window_bounds = array<i64: 32, 32>}, {transform_indices = @transform_1, window_bounds = array<i64: 32, 256>}, {transform_indices = @transform_2, window_bounds = array<i64: 32, 256>}]} {
    %c0 = arith.constant 0 : index
    %c0_0 = arith.constant 0 : index
    %0 = vector.load %arg2[%c0, %c0_0] : memref<32x32xf32, #tpu.memory_space<vmem>>, vector<32x32xf32>
    %cst = arith.constant -0.99999988 : f32
    %cst_1 = arith.constant 0.99999988 : f32
    %1 = vector.broadcast %cst : f32 to vector<32x32xf32>
    %2 = arith.maximumf %1, %0 : vector<32x32xf32>
    %3 = vector.broadcast %cst_1 : f32 to vector<32x32xf32>
    %4 = arith.minimumf %3, %2 : vector<32x32xf32>
    %cst_2 = arith.constant 1.000000e+00 : f32
    %5 = vector.broadcast %cst_2 : f32 to vector<32x32xf32>
    %6 = arith.addf %5, %4 : vector<32x32xf32>
    %cst_3 = arith.constant 1.000000e+00 : f32
    %7 = vector.broadcast %cst_3 : f32 to vector<32x32xf32>
    %8 = arith.subf %7, %4 : vector<32x32xf32>
    %9 = arith.divf %6, %8 : vector<32x32xf32>
    %10 = math.log %9 : vector<32x32xf32>
    %cst_4 = arith.constant 5.000000e-01 : f32
    %11 = vector.broadcast %cst_4 : f32 to vector<32x32xf32>
    %12 = arith.mulf %11, %10 : vector<32x32xf32>
    %13 = arith.truncf %12 : vector<32x32xf32> to vector<32x32xbf16>
    %c0_5 = arith.constant 0 : index
    %c0_6 = arith.constant 0 : index
    %14 = vector.load %arg3[%c0_5, %c0_6] : memref<32x256xbf16, #tpu.memory_space<vmem>>, vector<32x256xbf16>
    %cst_7 = arith.constant dense<0.000000e+00> : vector<32x256xf32>
    %15 = tpu.matmul %13, %14, %cst_7 {dimension_numbers = #tpu.dot_dimension_numbers<[1], [0], [0], [1], [0, 0, 1, 1], [], []>} : vector<32x32xbf16>, vector<32x256xbf16>, vector<32x256xf32> -> vector<32x256xf32>
    %c0_8 = arith.constant 0 : index
    %c0_9 = arith.constant 0 : index
    %16 = vector.load %arg4[%c0_8, %c0_9] : memref<32x256xf32, #tpu.memory_space<vmem>>, vector<32x256xf32>
    tpu.vector_store %arg4[%c0_8, %c0_9], %15 {strides = array<i32>} : memref<32x256xf32, #tpu.memory_space<vmem>>, vector<32x256xf32>,
    return
  }
  func.func @transform_0(%arg0: i32, %arg1: i32) -> (i32, i32) {
    %c0_i32 = arith.constant 0 : i32
    %c0_i32_0 = arith.constant 0 : i32
    return %arg0, %c0_i32 : i32, i32
  }
  func.func @transform_1(%arg0: i32, %arg1: i32) -> (i32, i32) {
    %c0_i32 = arith.constant 0 : i32
    %c0_i32_0 = arith.constant 0 : i32
    return %c0_i32, %arg1 : i32, i32
  }
  func.func @transform_2(%arg0: i32, %arg1: i32) -> (i32, i32) {
    %c0_i32 = arith.constant 0 : i32
    return %arg0, %arg1 : i32, i32
  }
}

module attributes {stable_mosaic.version = 11 : i64} {
  func.func @_mad_sum_kernel(%arg0: i32, %arg1: memref<16x256xf32, #tpu.memory_space<vmem>>, %arg2: memref<16x256xf32, #tpu.memory_space<vmem>>, %arg3: memref<1x1xf32, #tpu.memory_space<vmem>>) attributes {dimension_semantics = [#tpu.dimension_semantics<arbitrary>], iteration_bounds = array<i64: 1>, scalar_prefetch = 0 : i64, scratch_operands = 0 : i64, tpu.core_type = #tpu.core_type<tc>, window_params = [{transform_indices = @transform_0, window_bounds = array<i64: 16, 256>}, {transform_indices = @transform_1, window_bounds = array<i64: 16, 256>}, {pipeline_mode = #tpu.pipeline_mode<synchronous>, transform_indices = @transform_2, window_bounds = array<i64: 1, 1>}]} {
    %c0_i32 = arith.constant 0 : i32
    %0 = arith.cmpi eq, %arg0, %c0_i32 : i32
    %1 = arith.extui %0 : i1 to i32
    %c0_i32_0 = arith.constant 0 : i32
    %2 = arith.cmpi ne, %1, %c0_i32_0 : i32
    scf.if %2 {
      %cst_10 = arith.constant 0.000000e+00 : f32
      %18 = vector.broadcast %cst_10 : f32 to vector<1x1xf32>
      %c0_11 = arith.constant 0 : index
      %c0_12 = arith.constant 0 : index
      %19 = vector.load %arg3[%c0_11, %c0_12] : memref<1x1xf32, #tpu.memory_space<vmem>>, vector<1x1xf32>
      tpu.vector_store %arg3[%c0_11, %c0_12], %18 {strides = array<i32>} : memref<1x1xf32, #tpu.memory_space<vmem>>, vector<1x1xf32>,
    } else {
    }
    %c0 = arith.constant 0 : index
    %c0_1 = arith.constant 0 : index
    %3 = vector.load %arg3[%c0, %c0_1] : memref<1x1xf32, #tpu.memory_space<vmem>>, vector<1x1xf32>
    %c0_2 = arith.constant 0 : index
    %c0_3 = arith.constant 0 : index
    %4 = vector.load %arg1[%c0_2, %c0_3] : memref<16x256xf32, #tpu.memory_space<vmem>>, vector<16x256xf32>
    %c0_4 = arith.constant 0 : index
    %c0_5 = arith.constant 0 : index
    %5 = vector.load %arg2[%c0_4, %c0_5] : memref<16x256xf32, #tpu.memory_space<vmem>>, vector<16x256xf32>
    %6 = arith.subf %4, %5 : vector<16x256xf32>
    %7 = math.absf %6 : vector<16x256xf32>
    %8 = vector.shape_cast %7 : vector<16x256xf32> to vector<1x16x256xf32>
    %cst = arith.constant dense<0.000000e+00> : vector<1xf32>
    %9 = vector.multi_reduction <add>, %8, %cst [1, 2] : vector<1x16x256xf32> to vector<1xf32>
    %10 = vector.shape_cast %9 : vector<1xf32> to vector<1x1x1xf32>
    %11 = vector.extract %10[0, 0, 0] : f32 from vector<1x1x1xf32>
    %12 = vector.broadcast %11 : f32 to vector<1x1xf32>
    %13 = arith.addf %3, %12 : vector<1x1xf32>
    %c0_6 = arith.constant 0 : index
    %c0_7 = arith.constant 0 : index
    %14 = vector.load %arg3[%c0_6, %c0_7] : memref<1x1xf32, #tpu.memory_space<vmem>>, vector<1x1xf32>
    tpu.vector_store %arg3[%c0_6, %c0_7], %13 {strides = array<i32>} : memref<1x1xf32, #tpu.memory_space<vmem>>, vector<1x1xf32>,
    %c0_i32_8 = arith.constant 0 : i32
    %15 = arith.cmpi eq, %arg0, %c0_i32_8 : i32
    %16 = arith.extui %15 : i1 to i32
    %c0_i32_9 = arith.constant 0 : i32
    %17 = arith.cmpi ne, %16, %c0_i32_9 : i32
    scf.if %17 {
      %c0_10 = arith.constant 0 : index
      %c0_11 = arith.constant 0 : index
      %18 = vector.load %arg3[%c0_10, %c0_11] : memref<1x1xf32, #tpu.memory_space<vmem>>, vector<1x1xf32>
      %cst_12 = arith.constant 2.44140625E-4 : f32
      %19 = vector.broadcast %cst_12 : f32 to vector<1x1xf32>
      %20 = arith.mulf %18, %19 : vector<1x1xf32>
      %c0_13 = arith.constant 0 : index
      %c0_14 = arith.constant 0 : index
      %21 = vector.load %arg3[%c0_13, %c0_14] : memref<1x1xf32, #tpu.memory_space<vmem>>, vector<1x1xf32>
      tpu.vector_store %arg3[%c0_13, %c0_14], %20 {strides = array<i32>} : memref<1x1xf32, #tpu.memory_space<vmem>>, vector<1x1xf32>,
    } else {
    }
    return
  }
  func.func @transform_0(%arg0: i32) -> (i32, i32) {
    %c0_i32 = arith.constant 0 : i32
    %c0_i32_0 = arith.constant 0 : i32
    return %arg0, %c0_i32 : i32, i32
  }
  func.func @transform_1(%arg0: i32) -> (i32, i32) {
    %c0_i32 = arith.constant 0 : i32
    %c0_i32_0 = arith.constant 0 : i32
    return %arg0, %c0_i32 : i32, i32
  }
  func.func @transform_2(%arg0: i32) -> (i32, i32) {
    %c0_i32 = arith.constant 0 : i32
    %c0_i32_0 = arith.constant 0 : i32
    %c0_i32_1 = arith.constant 0 : i32
    return %c0_i32, %c0_i32_0 : i32, i32
  }
}

module attributes {stable_mosaic.version = 11 : i64} {
  func.func @_mad_sum_kernel(%arg0: i32, %arg1: memref<16x8xf32, #tpu.memory_space<vmem>>, %arg2: memref<16x8xf32, #tpu.memory_space<vmem>>, %arg3: memref<1x1xf32, #tpu.memory_space<vmem>>) attributes {dimension_semantics = [#tpu.dimension_semantics<arbitrary>], iteration_bounds = array<i64: 1>, scalar_prefetch = 0 : i64, scratch_operands = 0 : i64, tpu.core_type = #tpu.core_type<tc>, window_params = [{transform_indices = @transform_0, window_bounds = array<i64: 16, 8>}, {transform_indices = @transform_1, window_bounds = array<i64: 16, 8>}, {pipeline_mode = #tpu.pipeline_mode<synchronous>, transform_indices = @transform_2, window_bounds = array<i64: 1, 1>}]} {
    %c0_i32 = arith.constant 0 : i32
    %0 = arith.cmpi eq, %arg0, %c0_i32 : i32
    %1 = arith.extui %0 : i1 to i32
    %c0_i32_0 = arith.constant 0 : i32
    %2 = arith.cmpi ne, %1, %c0_i32_0 : i32
    scf.if %2 {
      %cst_10 = arith.constant 0.000000e+00 : f32
      %18 = vector.broadcast %cst_10 : f32 to vector<1x1xf32>
      %c0_11 = arith.constant 0 : index
      %c0_12 = arith.constant 0 : index
      %19 = vector.load %arg3[%c0_11, %c0_12] : memref<1x1xf32, #tpu.memory_space<vmem>>, vector<1x1xf32>
      tpu.vector_store %arg3[%c0_11, %c0_12], %18 {strides = array<i32>} : memref<1x1xf32, #tpu.memory_space<vmem>>, vector<1x1xf32>,
    } else {
    }
    %c0 = arith.constant 0 : index
    %c0_1 = arith.constant 0 : index
    %3 = vector.load %arg3[%c0, %c0_1] : memref<1x1xf32, #tpu.memory_space<vmem>>, vector<1x1xf32>
    %c0_2 = arith.constant 0 : index
    %c0_3 = arith.constant 0 : index
    %4 = vector.load %arg1[%c0_2, %c0_3] : memref<16x8xf32, #tpu.memory_space<vmem>>, vector<16x8xf32>
    %c0_4 = arith.constant 0 : index
    %c0_5 = arith.constant 0 : index
    %5 = vector.load %arg2[%c0_4, %c0_5] : memref<16x8xf32, #tpu.memory_space<vmem>>, vector<16x8xf32>
    %6 = arith.subf %4, %5 : vector<16x8xf32>
    %7 = math.absf %6 : vector<16x8xf32>
    %8 = vector.shape_cast %7 : vector<16x8xf32> to vector<1x16x8xf32>
    %cst = arith.constant dense<0.000000e+00> : vector<1xf32>
    %9 = vector.multi_reduction <add>, %8, %cst [1, 2] : vector<1x16x8xf32> to vector<1xf32>
    %10 = vector.shape_cast %9 : vector<1xf32> to vector<1x1x1xf32>
    %11 = vector.extract %10[0, 0, 0] : f32 from vector<1x1x1xf32>
    %12 = vector.broadcast %11 : f32 to vector<1x1xf32>
    %13 = arith.addf %3, %12 : vector<1x1xf32>
    %c0_6 = arith.constant 0 : index
    %c0_7 = arith.constant 0 : index
    %14 = vector.load %arg3[%c0_6, %c0_7] : memref<1x1xf32, #tpu.memory_space<vmem>>, vector<1x1xf32>
    tpu.vector_store %arg3[%c0_6, %c0_7], %13 {strides = array<i32>} : memref<1x1xf32, #tpu.memory_space<vmem>>, vector<1x1xf32>,
    %c0_i32_8 = arith.constant 0 : i32
    %15 = arith.cmpi eq, %arg0, %c0_i32_8 : i32
    %16 = arith.extui %15 : i1 to i32
    %c0_i32_9 = arith.constant 0 : i32
    %17 = arith.cmpi ne, %16, %c0_i32_9 : i32
    scf.if %17 {
      %c0_10 = arith.constant 0 : index
      %c0_11 = arith.constant 0 : index
      %18 = vector.load %arg3[%c0_10, %c0_11] : memref<1x1xf32, #tpu.memory_space<vmem>>, vector<1x1xf32>
      %cst_12 = arith.constant 7.812500e-03 : f32
      %19 = vector.broadcast %cst_12 : f32 to vector<1x1xf32>
      %20 = arith.mulf %18, %19 : vector<1x1xf32>
      %c0_13 = arith.constant 0 : index
      %c0_14 = arith.constant 0 : index
      %21 = vector.load %arg3[%c0_13, %c0_14] : memref<1x1xf32, #tpu.memory_space<vmem>>, vector<1x1xf32>
      tpu.vector_store %arg3[%c0_13, %c0_14], %20 {strides = array<i32>} : memref<1x1xf32, #tpu.memory_space<vmem>>, vector<1x1xf32>,
    } else {
    }
    return
  }
  func.func @transform_0(%arg0: i32) -> (i32, i32) {
    %c0_i32 = arith.constant 0 : i32
    %c0_i32_0 = arith.constant 0 : i32
    return %arg0, %c0_i32 : i32, i32
  }
  func.func @transform_1(%arg0: i32) -> (i32, i32) {
    %c0_i32 = arith.constant 0 : i32
    %c0_i32_0 = arith.constant 0 : i32
    return %arg0, %c0_i32 : i32, i32
  }
  func.func @transform_2(%arg0: i32) -> (i32, i32) {
    %c0_i32 = arith.constant 0 : i32
    %c0_i32_0 = arith.constant 0 : i32
    %c0_i32_1 = arith.constant 0 : i32
    return %c0_i32, %c0_i32_0 : i32, i32
  }
}

</mosaic_0001>

<llo_original>
// kernel: _lambda_.5
$region0: #{_lambda_.5}
  #allocation0 [shape = 'u32[]', space=smem, size = 0x4, offset = 0x4, fixed_abs, tag = 'smem constant byte address 0x4 - core index']
  #allocation1 [shape = 'u32[144,128]{1,0:T(1,128)}', space=vmem, size = 0x12000, scoped, tag = 'internal scratch']
  %s0 = inlined_call_operand.vmem [shape: f32[16,256], index: 0, kind: input, shape index: {}]
  %s1 = inlined_call_operand.vmem [shape: f32[16,256], index: 1, kind: input, shape index: {}]
  %s2 = inlined_call_operand.hbm [shape: f32[1,1], index: 2, kind: output, shape index: {}]
  %s3 = sld [smem:[#allocation0]]
  $region26: #{_lambda_.5} parent=0
    _
  %s5 = ssub.s32 1, %s3
  %s6 = scalar_select 0, %s5, %s3
  $region1: #{_lambda_.5} parent=0
    #allocation2 [shape = 'u8[512]{0}', space=vmem, size = 0x400, scoped, tag = 'output window, operand 0, single buffered']
    #allocation3 [shape = 's32[1]{0}', space=sflag, size = 0x4, scoped, tag = 'scoped memory for _lambda_.5']
    %7 = vsyncpa [#allocation3], 0
    // Predicated region
    $region2: #{_lambda_.5} parent=1 // pred_check
      _
    $region3: #{_lambda_.5} parent=1 // pred_check_branch
      %9 = sbr.rel (0) target = $region5
    $region4: #{_lambda_.5} parent=1 // pred_region
      _
    $region5: #{_lambda_.5} parent=1 // pred_fallthru
      _
    // Predicated region
    $region6: #{_lambda_.5} parent=1 // pred_check
      _
    $region7: #{_lambda_.5} parent=1 // pred_check_branch
      %11 = sbr.rel (0) target = $region9
    $region8: #{_lambda_.5} parent=1 // pred_region
      _
    $region9: #{_lambda_.5} parent=1 // pred_fallthru
      _
    %p12 = scmp.eq.s32.totalorder 0, 0
    // Predicated region
    $region10: #{_lambda_.5} parent=1 // pred_check
      %p13 = pneg %p12
    $region11: #{_lambda_.5} parent=1 // pred_check_branch
      %15 = sbr.rel (%p13) target = $region13
    $region12: #{_lambda_.5} parent=1 // pred_region
      %vm16 = vcmask 0
      %17 = vst.msk [vmem:[#allocation2] sm:$0x1] %vm16, 0.0
    $region13: #{_lambda_.5} parent=1 // pred_fallthru
      _
    %v18 = vld [vmem:[#allocation2] sm:$0x1]
    %v19 = vld [vmem:[%s0] sm:$0xff]
    %v20 = vld [vmem:[%s0 + $0x8] sm:$0xff]
    %v21 = vld [vmem:[%s0 + $0x10] sm:$0xff]
    %v22 = vld [vmem:[%s0 + $0x18] sm:$0xff]
    %v23 = vld [vmem:[%s1] sm:$0xff]
    %v24 = vld [vmem:[%s1 + $0x8] sm:$0xff]
    %v25 = vld [vmem:[%s1 + $0x10] sm:$0xff]
    %v26 = vld [vmem:[%s1 + $0x18] sm:$0xff]
    %v27 = vsub.f32 %v19, %v23
    %v28 = vsub.f32 %v20, %v24
    %v29 = vsub.f32 %v21, %v25
    %v30 = vsub.f32 %v22, %v26
    %v31 = vand.u32 2147483647, %v27
    %v32 = vand.u32 2147483647, %v28
    %v33 = vand.u32 2147483647, %v29
    %v34 = vand.u32 2147483647, %v30
    %v35 = vadd.f32 %v31, %v32
    %v36 = vadd.f32 %v35, %v33
    %v37 = vadd.f32 %v36, %v34
    %38 = vadd.xlane.f32.xlu0 %v37
    %v39 = vpop.xlane.xlu0 %38
    %v40 = vrot.slane %v39, 4
    %v41 = vadd.f32 %v39, %v40
    %v42 = vrot.slane %v41, 2
    %v43 = vadd.f32 %v41, %v42
    %v44 = vrot.slane %v43, 1
    %v45 = vadd.f32 %v43, %v44
    %s46 = vtos %v45
    %v47 = vstv %s46
    %v48 = vadd.f32 %v18, %v47
    %vm49 = vcmask 0
    %50 = vst.msk [vmem:[#allocation2] sm:$0x1] %vm49, %v48
    // Predicated region
    $region14: #{_lambda_.5} parent=1 // pred_check
      %p51 = pneg %p12
    $region15: #{_lambda_.5} parent=1 // pred_check_branch
      %53 = sbr.rel (%p51) target = $region17
    $region16: #{_lambda_.5} parent=1 // pred_region
      %v54 = vld [vmem:[#allocation2] sm:$0x1]
      %v55 = vmul.f32 %v54, 0.00024414063
      %56 = vst.msk [vmem:[#allocation2] sm:$0x1] %vm49, %v55
    $region17: #{_lambda_.5} parent=1 // pred_fallthru
      _
    // Predicated region
    $region18: #{_lambda_.5} parent=1 // pred_check
      _
    $region19: #{_lambda_.5} parent=1 // pred_check_branch
      %58 = sbr.rel (0) target = $region21
    $region20: #{_lambda_.5} parent=1 // pred_region
      %s60 = ssub.s32 16, 16
      %61 = vsyncadd [#allocation3], %s60
      %s63 = sshll.u32 [#allocation2], 4
      %s64 = int_to_ptr.vmem [resolvable:$true] %s63
      %66 = dma.vmem_to_hbm [thread:$0]  %s64, 16, %s2, [#allocation3]
    $region21: #{_lambda_.5} parent=1 // pred_fallthru
      _
    // Predicated region
    $region22: #{_lambda_.5} parent=1 // pred_check
      _
    $region23: #{_lambda_.5} parent=1 // pred_check_branch
      %68 = sbr.rel (0) target = $region25
    $region24: #{_lambda_.5} parent=1 // pred_region
      %69 = dma.done [#allocation3], 16
    $region25: #{_lambda_.5} parent=1 // pred_fallthru
      _
    %70 = vsyncpa [#allocation3], 1

// kernel: _lambda_.4
$region0: #{_lambda_.4}
  #allocation0 [shape = 'u32[]', space=smem, size = 0x4, offset = 0x4, fixed_abs, tag = 'smem constant byte address 0x4 - core index']
  #allocation1 [shape = 'u32[144,128]{1,0:T(1,128)}', space=vmem, size = 0x12000, scoped, tag = 'internal scratch']
  %s0 = inlined_call_operand.vmem [shape: f32[32,32], index: 0, kind: input, shape index: {}]
  %s1 = inlined_call_operand.vmem [shape: bf16[32,256], index: 1, kind: input, shape index: {}]
  %s2 = inlined_call_operand.vmem [shape: f32[32,256], index: 2, kind: output, shape index: {}]
  %s3 = sld [smem:[#allocation0]]
  $region18: #{_lambda_.4} parent=0
    _
  %s5 = ssub.s32 1, %s3
  %s6 = scalar_select 0, %s5, %s3
  // Predicated region
  $region2: #{_lambda_.4} parent=0 // pred_check
    _
  $region3: #{_lambda_.4} parent=0 // pred_check_branch
    %8 = sbr.rel (0) target = $region5
  $region4: #{_lambda_.4} parent=0 // pred_region
    _
  $region5: #{_lambda_.4} parent=0 // pred_fallthru
    _
  // Predicated region
  $region6: #{_lambda_.4} parent=0 // pred_check
    _
  $region7: #{_lambda_.4} parent=0 // pred_check_branch
    %10 = sbr.rel (0) target = $region9
  $region8: #{_lambda_.4} parent=0 // pred_region
    _
  $region9: #{_lambda_.4} parent=0 // pred_fallthru
    _
  %v12 = vld [vmem:[%s0] sm:$0xff]
  %v13 = vld [vmem:[%s0 + $0x8] sm:$0xff]
  %v14 = vld [vmem:[%s0 + $0x10] sm:$0xff]
  %v15 = vld [vmem:[%s0 + $0x18] sm:$0xff]
  %v16 = vmax.f32 %v12, -0.9999999
  %v17 = vmax.f32 %v13, -0.9999999
  %v18 = vmax.f32 %v14, -0.9999999
  %v19 = vmax.f32 %v15, -0.9999999
  %v20 = vmin.f32 %v16, 0.9999999
  %v21 = vmin.f32 %v17, 0.9999999
  %v22 = vmin.f32 %v18, 0.9999999
  %v23 = vmin.f32 %v19, 0.9999999
  %v24 = vadd.f32 %v20, 1.0
  %v25 = vadd.f32 %v21, 1.0
  %v26 = vadd.f32 %v22, 1.0
  %v27 = vadd.f32 %v23, 1.0
  %v28 = vsub.f32 1.0, %v20
  %v29 = vsub.f32 1.0, %v21
  %v30 = vsub.f32 1.0, %v22
  %v31 = vsub.f32 1.0, %v23
  %v32 = vrcp.pop %v28
  %v33 = vmul.f32 %v24, %v32
  %v34 = vrcp.pop %v29
  %v35 = vmul.f32 %v25, %v34
  %v36 = vrcp.pop %v30
  %v37 = vmul.f32 %v26, %v36
  %v38 = vrcp.pop %v31
  %v39 = vmul.f32 %v27, %v38
  %v40 = vlog2.pop %v33
  %v41 = vmul.f32 %v40, 0.6931472
  %v42 = vlog2.pop %v35
  %v43 = vmul.f32 %v42, 0.6931472
  %v44 = vlog2.pop %v37
  %v45 = vmul.f32 %v44, 0.6931472
  %v46 = vlog2.pop %v39
  %v47 = vmul.f32 %v46, 0.6931472
  %v48 = vmul.f32 %v41, 0.5
  %v49 = vmul.f32 %v43, 0.5
  %v50 = vmul.f32 %v45, 0.5
  %v51 = vmul.f32 %v47, 0.5
  %v52 = vpack.c.bf16 %v49, %v48
  %v53 = vpack.c.bf16 %v51, %v50
  %v54 = vld [vmem:[%s1] sm:$0xff]
  %v55 = vld [vmem:[%s1 + $0x8] sm:$0xff]
  %v56 = vld [vmem:[%s1 + $0x10] sm:$0xff]
  %v57 = vld [vmem:[%s1 + $0x18] sm:$0xff]
  %v62 = vunpack.c.l.b16 %v54
  %v63 = vunpack.c.h.b16 %v54
  %v64 = vunpack.c.l.b16 %v55
  %v65 = vunpack.c.h.b16 %v55
  %v66 = vunpack.c.l.b16 %v56
  %v67 = vunpack.c.h.b16 %v56
  %v68 = vunpack.c.l.b16 %v57
  %v69 = vunpack.c.h.b16 %v57
  %v70 = vpack.c.b16 %v64, %v62
  %v71 = vpack.c.b16 %v65, %v63
  %v72 = vpack.c.b16 %v68, %v66
  %v73 = vpack.c.b16 %v69, %v67
  %vm78 = vcmask 261120
  %v80 = vsel %vm78, %v52, 0
  %v83 = vsel %vm78, %v53, 0
  %85 = vmatprep.subr.bf16.mxu0 %v71
  %86 = vmatpush1.bf16.msra.mxu0 %v70
  %87 = vmatprep.subr.bf16.mxu0 %v73
  %88 = vmatpush1.bf16.msra.mxu0 %v72
  %89 = vmatprep.subr.bf16.mxu0 0
  %90 = vmatpush1.bf16.msra.mxu0 0
  %91 = vmatprep.subr.bf16.mxu0 0
  %92 = vmatpush1.bf16.msra.mxu0 0
  %93 = vmatprep.subr.bf16.mxu0 0
  %94 = vmatpush1.bf16.msra.mxu0 0
  %95 = vmatprep.subr.bf16.mxu0 0
  %96 = vmatpush1.bf16.msra.mxu0 0
  %97 = vmatprep.subr.bf16.mxu0 0
  %98 = vmatpush1.bf16.msra.mxu0 0
  %99 = vmatprep.subr.bf16.mxu0 0
  %100 = vmatpush1.bf16.msra.mxu0 0
  %101 = vmatprep.subr.bf16.mxu0 0
  %102 = vmatpush1.bf16.msra.mxu0 0
  %103 = vmatprep.subr.bf16.mxu0 0
  %104 = vmatpush1.bf16.msra.mxu0 0
  %105 = vmatprep.subr.bf16.mxu0 0
  %106 = vmatpush1.bf16.msra.mxu0 0
  %107 = vmatprep.subr.bf16.mxu0 0
  %108 = vmatpush1.bf16.msra.mxu0 0
  %109 = vmatprep.subr.bf16.mxu0 0
  %110 = vmatpush1.bf16.msra.mxu0 0
  %111 = vmatprep.subr.bf16.mxu0 0
  %112 = vmatpush1.bf16.msra.mxu0 0
  %113 = vmatprep.subr.bf16.mxu0 0
  %114 = vmatpush1.bf16.msra.mxu0 0
  %115 = vmatprep.subr.bf16.mxu0 0
  %116 = vmatpush1.bf16.msra.mxu0 0
  %117 = vmatprep.mubr.bf16.mxu0 0
  %118 = vmatmul.mubr.bf16.gmra.mrb[0].mxu0 %v80
  %v119 = vpop.f32.mrb[0].mxu0
  %v120 = vadd.f32 0.0, %v119
  %v121 = vpop.f32.mrb[0].mxu0
  %v122 = vadd.f32 0.0, %v121
  %v123 = vpop.f32.mrb[0].mxu0
  %v124 = vadd.f32 0.0, %v123
  %v125 = vpop.f32.mrb[0].mxu0
  %v126 = vadd.f32 0.0, %v125
  %127 = vmatprep.mubr.bf16.mxu0 0
  %128 = vmatmul.mubr.bf16.gmra.mrb[0].mxu0 %v83
  %v129 = vpop.f32.mrb[0].mxu0
  %v130 = vadd.f32 0.0, %v129
  %v131 = vpop.f32.mrb[0].mxu0
  %v132 = vadd.f32 0.0, %v131
  %v133 = vpop.f32.mrb[0].mxu0
  %v134 = vadd.f32 0.0, %v133
  %v135 = vpop.f32.mrb[0].mxu0
  %v136 = vadd.f32 0.0, %v135
  %137 = vdwg.mxu0
  %138 = vst [vmem:[%s2] sm:$0xff] %v120
  %139 = vst [vmem:[%s2 + $0x8] sm:$0xff] %v122
  %140 = vst [vmem:[%s2 + $0x10] sm:$0xff] %v124
  %141 = vst [vmem:[%s2 + $0x18] sm:$0xff] %v126
  %142 = vst [vmem:[%s2 + $0x20] sm:$0xff] %v130
  %143 = vst [vmem:[%s2 + $0x28] sm:$0xff] %v132
  %144 = vst [vmem:[%s2 + $0x30] sm:$0xff] %v134
  %145 = vst [vmem:[%s2 + $0x38] sm:$0xff] %v136
  // Predicated region
  $region10: #{_lambda_.4} parent=0 // pred_check
    _
  $region11: #{_lambda_.4} parent=0 // pred_check_branch
    %147 = sbr.rel (0) target = $region13
  $region12: #{_lambda_.4} parent=0 // pred_region
    _
  $region13: #{_lambda_.4} parent=0 // pred_fallthru
    _
  // Predicated region
  $region14: #{_lambda_.4} parent=0 // pred_check
    _
  $region15: #{_lambda_.4} parent=0 // pred_check_branch
    %149 = sbr.rel (0) target = $region17
  $region16: #{_lambda_.4} parent=0 // pred_region
    _
  $region17: #{_lambda_.4} parent=0 // pred_fallthru
    _

// kernel: _lambda_.3
$region0: #{_lambda_.3}
  #allocation0 [shape = 'u32[]', space=smem, size = 0x4, offset = 0x4, fixed_abs, tag = 'smem constant byte address 0x4 - core index']
  #allocation1 [shape = 'u32[144,128]{1,0:T(1,128)}', space=vmem, size = 0x12000, scoped, tag = 'internal scratch']
  %s0 = inlined_call_operand.vmem [shape: f32[16,8], index: 0, kind: input, shape index: {}]
  %s1 = inlined_call_operand.vmem [shape: f32[16,8], index: 1, kind: input, shape index: {}]
  %s2 = inlined_call_operand.hbm [shape: f32[1,1], index: 2, kind: output, shape index: {}]
  %s3 = sld [smem:[#allocation0]]
  $region26: #{_lambda_.3} parent=0
    _
  %s5 = ssub.s32 1, %s3
  %s6 = scalar_select 0, %s5, %s3
  $region1: #{_lambda_.3} parent=0
    #allocation2 [shape = 'u8[512]{0}', space=vmem, size = 0x400, scoped, tag = 'output window, operand 0, single buffered']
    #allocation3 [shape = 's32[1]{0}', space=sflag, size = 0x4, scoped, tag = 'scoped memory for _lambda_.3']
    %7 = vsyncpa [#allocation3], 0
    // Predicated region
    $region2: #{_lambda_.3} parent=1 // pred_check
      _
    $region3: #{_lambda_.3} parent=1 // pred_check_branch
      %9 = sbr.rel (0) target = $region5
    $region4: #{_lambda_.3} parent=1 // pred_region
      _
    $region5: #{_lambda_.3} parent=1 // pred_fallthru
      _
    // Predicated region
    $region6: #{_lambda_.3} parent=1 // pred_check
      _
    $region7: #{_lambda_.3} parent=1 // pred_check_branch
      %11 = sbr.rel (0) target = $region9
    $region8: #{_lambda_.3} parent=1 // pred_region
      _
    $region9: #{_lambda_.3} parent=1 // pred_fallthru
      _
    %p12 = scmp.eq.s32.totalorder 0, 0
    // Predicated region
    $region10: #{_lambda_.3} parent=1 // pred_check
      %p13 = pneg %p12
    $region11: #{_lambda_.3} parent=1 // pred_check_branch
      %15 = sbr.rel (%p13) target = $region13
    $region12: #{_lambda_.3} parent=1 // pred_region
      %vm16 = vcmask 0
      %17 = vst.msk [vmem:[#allocation2] sm:$0x1] %vm16, 0.0
    $region13: #{_lambda_.3} parent=1 // pred_fallthru
      _
    %v18 = vld [vmem:[#allocation2] sm:$0x1]
    %v19 = vld [vmem:[%s0] sm:$0xff]
    %v20 = vld [vmem:[%s0 + $0x8] sm:$0xff]
    %v21 = vld [vmem:[%s1] sm:$0xff]
    %v22 = vld [vmem:[%s1 + $0x8] sm:$0xff]
    %v23 = vsub.f32 %v19, %v21
    %v24 = vsub.f32 %v20, %v22
    %v25 = vand.u32 2147483647, %v23
    %v26 = vand.u32 2147483647, %v24
    %vm27 = vcmask 64512
    %v28 = vsel %vm27, %v25, 0.0
    %v29 = vsel %vm27, %v26, 0.0
    %v30 = vadd.f32 %v28, %v29
    %31 = vadd.xlane.f32.xlu0 %v30
    %v32 = vpop.xlane.xlu0 %31
    %v33 = vrot.slane %v32, 4
    %v34 = vadd.f32 %v32, %v33
    %v35 = vrot.slane %v34, 2
    %v36 = vadd.f32 %v34, %v35
    %v37 = vrot.slane %v36, 1
    %v38 = vadd.f32 %v36, %v37
    %s39 = vtos %v38
    %v40 = vstv %s39
    %v41 = vadd.f32 %v18, %v40
    %vm42 = vcmask 0
    %43 = vst.msk [vmem:[#allocation2] sm:$0x1] %vm42, %v41
    // Predicated region
    $region14: #{_lambda_.3} parent=1 // pred_check
      %p44 = pneg %p12
    $region15: #{_lambda_.3} parent=1 // pred_check_branch
      %46 = sbr.rel (%p44) target = $region17
    $region16: #{_lambda_.3} parent=1 // pred_region
      %v47 = vld [vmem:[#allocation2] sm:$0x1]
      %v48 = vmul.f32 %v47, 0.0078125
      %49 = vst.msk [vmem:[#allocation2] sm:$0x1] %vm42, %v48
    $region17: #{_lambda_.3} parent=1 // pred_fallthru
      _
    // Predicated region
    $region18: #{_lambda_.3} parent=1 // pred_check
      _
    $region19: #{_lambda_.3} parent=1 // pred_check_branch
      %51 = sbr.rel (0) target = $region21
    $region20: #{_lambda_.3} parent=1 // pred_region
      %s53 = ssub.s32 16, 16
      %54 = vsyncadd [#allocation3], %s53
      %s56 = sshll.u32 [#allocation2], 4
      %s57 = int_to_ptr.vmem [resolvable:$true] %s56
      %59 = dma.vmem_to_hbm [thread:$0]  %s57, 16, %s2, [#allocation3]
    $region21: #{_lambda_.3} parent=1 // pred_fallthru
      _
    // Predicated region
    $region22: #{_lambda_.3} parent=1 // pred_check
      _
    $region23: #{_lambda_.3} parent=1 // pred_check_branch
      %61 = sbr.rel (0) target = $region25
    $region24: #{_lambda_.3} parent=1 // pred_region
      %62 = dma.done [#allocation3], 16
    $region25: #{_lambda_.3} parent=1 // pred_fallthru
      _
    %63 = vsyncpa [#allocation3], 1

</llo_original>
